<compile_context>
chip_gen: v7x
topology: tpu7x:2x2x1
jax: 0.10.0
libtpu: 0.0.40
codegen_flags: <defaults>
</compile_context>

<pallas_src>
import numpy as np
import jax
import jax.numpy as jnp
from jax import lax
from jax.experimental import pallas as pl
from jax.experimental.pallas import tpu as pltpu


def _rup8(n):
    return ((n + 7) // 8) * 8


def mappingnet_kernel(x_ref, w1_ref, b1_ref, wenc_ref, benc_ref, out_ref,
                      first_buf, enc_buf):
    """Single grid step handles the whole batch.

    x_ref    : (B, T, Cin)           channels-last input (bf16 or f32)
    w1_ref   : (7*Cin, D)            first conv, im2col-flattened (row = k*Cin + c)
    b1_ref   : (1, D)                first conv bias (f32)
    wenc_ref : (L, 3*D, D)           encoder convs, im2col-flattened (row = k*D + c)
    benc_ref : (L, 1, D)             encoder biases (f32)
    out_ref  : (B, D)                pooled descriptors (f32)
    first_buf: (B*t1p, 7*Cin)        VMEM scratch (mm dtype), first-conv im2col
    enc_buf  : (B*rup8(t1-6), 3*D)   VMEM scratch (mm dtype), encoder im2col
    """
    B, T, Cin = x_ref.shape
    D = w1_ref.shape[1]
    K1 = w1_ref.shape[0] // Cin            # 7
    layer = wenc_ref.shape[0]
    mm_dtype = w1_ref.dtype                # bf16 (or f32 when compute_dtype=f32)
    t1 = T - (K1 - 1)
    t1p = first_buf.shape[0] // B          # t1 rounded up to a sublane multiple

    # ---- first: Conv1d(coeff_nc, D, k=7) as one fused im2col matmul ---------
    # Row b*t1p + t of first_buf = [x[b, t+0], ..., x[b, t+6]]  (col = k*Cin + c).
    # Pad rows [b*t1p + t1, (b+1)*t1p) are never written nor read back.
    for b in range(B):                     # B, K1 static -> fully unrolled
        xb = x_ref[b]                      # (T, Cin) already in mm_dtype
        for k in range(K1):
            first_buf[b * t1p:b * t1p + t1, k * Cin:(k + 1) * Cin] = xb[k:k + t1, :]
    acc = jnp.dot(first_buf[...], w1_ref[...],
                  preferred_element_type=jnp.float32) + b1_ref[...]   # (B*t1p, D) f32

    # Per-sequence views (8-aligned starts); matmuls stay batch-flattened.
    accs = [acc[b * t1p:b * t1p + t1, :] for b in range(B)]

    # ---- encoder_i: LeakyReLU(0.1) -> Conv1d(D, D, k=3, dilation=3) + residual
    cur = t1
    for i in range(layer):
        new = cur - 6                      # (k-1)*dilation = 6
        newp = _rup8(new)                  # 8-aligned per-batch row stride
        for b in range(B):
            a_b = accs[b]                                              # (cur, D) f32
            a_b = jnp.where(a_b >= 0, a_b, 0.1 * a_b).astype(mm_dtype)
            for k in range(3):
                enc_buf[b * newp:b * newp + new, k * D:(k + 1) * D] = \
                    a_b[3 * k:3 * k + new, :]
        conv = jnp.dot(enc_buf[0:B * newp, :], wenc_ref[i],
                       preferred_element_type=jnp.float32) + benc_ref[i]
        accs = [conv[b * newp:b * newp + new, :] + accs[b][3:3 + new, :]
                for b in range(B)]         # residual == out[:, :, 3:-3]
        cur = new

    # ---- AdaptiveAvgPool1d(1): mean over remaining time steps ---------------
    pooled = jnp.concatenate(
        [jnp.mean(accs[b], axis=0, keepdims=True) for b in range(B)], axis=0)
    out_ref[...] = pooled.astype(out_ref.dtype)     # single (B, D) store


def mappingnet_forward(x_nct, w1, b1, wenc, benc, layer, *,
                       compute_dtype=jnp.bfloat16):
    """x_nct: (B, coeff_nc, T) like the PyTorch module.  Returns (B, D, 1)."""
    B, Cin, T = x_nct.shape
    D, _, K1 = w1.shape
    assert layer >= 1 and wenc.shape[0] == layer
    assert T >= K1 + 6 * layer, "sequence too short for kernel/dilation stack"
    t1 = T - (K1 - 1)
    t1p = _rup8(t1)
    enc_rows = B * _rup8(t1 - 6)           # widest encoder layer (layer 0)

    # channels-last + bf16 for the MXU (single fused transpose+convert in XLA).
    # TODO(synk): accept channels-last input upstream to drop this transpose.
    x = jnp.transpose(x_nct, (0, 2, 1)).astype(compute_dtype)             # (B, T, Cin)
    # (D, Cin, K1) -> (K1, Cin, D) -> (K1*Cin, D): row index = k*Cin + c
    w1f = jnp.transpose(w1, (2, 1, 0)).reshape(K1 * Cin, D).astype(compute_dtype)
    b1r = b1.reshape(1, D).astype(jnp.float32)
    # (L, Dout, Din, 3) -> (L, 3, Din, Dout) -> (L, 3*Din, Dout): row = k*Din + c
    wencf = jnp.transpose(wenc, (0, 3, 2, 1)).reshape(layer, 3 * D, D)
    wencf = wencf.astype(compute_dtype)
    bencr = benc.reshape(layer, 1, D).astype(jnp.float32)

    pooled = pl.pallas_call(
        mappingnet_kernel,
        out_shape=jax.ShapeDtypeStruct((B, D), jnp.float32),
        grid=(1,),
        in_specs=[
            pl.BlockSpec((B, T, Cin), lambda i: (0, 0, 0)),
            pl.BlockSpec((K1 * Cin, D), lambda i: (0, 0)),
            pl.BlockSpec((1, D), lambda i: (0, 0)),
            pl.BlockSpec((layer, 3 * D, D), lambda i: (0, 0, 0)),
            pl.BlockSpec((layer, 1, D), lambda i: (0, 0, 0)),
        ],
        out_specs=pl.BlockSpec((B, D), lambda i: (0, 0)),
        scratch_shapes=[
            pltpu.VMEM((B * t1p, K1 * Cin), compute_dtype),   # first-conv im2col
            pltpu.VMEM((enc_rows, 3 * D), compute_dtype),     # encoder im2col
        ],
        compiler_params=pltpu.CompilerParams(
            dimension_semantics=("arbitrary",)),
    )(x, w1f, b1r, wencf, bencr)

    return pooled[:, :, None]                                # (B, D, 1) like PyTorch


def mappingnet_ref(x, w1, b1, wenc, benc, layer):
    """Pure-JAX reference matching PyTorch Conv1d semantics exactly (f32)."""
    dn = ("NCH", "OIH", "NCH")
    out = lax.conv_general_dilated(x, w1, (1,), "VALID",
                                   dimension_numbers=dn) + b1[None, :, None]
    for i in range(layer):
        act = jnp.where(out >= 0, out, 0.1 * out)
        c = lax.conv_general_dilated(act, wenc[i], (1,), "VALID",
                                     rhs_dilation=(3,),
                                     dimension_numbers=dn) + benc[i][None, :, None]
        out = c + out[:, :, 3:-3]
    return jnp.mean(out, axis=2, keepdims=True)


if __name__ == "__main__":
    # small shapes consistent with the module
    coeff_nc, descriptor_nc, layer = 8, 32, 2
    B, T = 2, 32                       # final length = 32 - 6 - 12 = 14

    key = jax.random.PRNGKey(0)
    keys = jax.random.split(key, 5)
    w1 = 0.1 * jax.random.normal(keys[0], (descriptor_nc, coeff_nc, 7), jnp.float32)
    b1 = 0.1 * jax.random.normal(keys[1], (descriptor_nc,), jnp.float32)
    wenc = 0.1 * jax.random.normal(keys[2], (layer, descriptor_nc, descriptor_nc, 3),
                                   jnp.float32)
    benc = 0.1 * jax.random.normal(keys[3], (layer, descriptor_nc), jnp.float32)
    x = jax.random.normal(keys[4], (B, coeff_nc, T), jnp.float32)

    ref = mappingnet_ref(x, w1, b1, wenc, benc, layer)

    # f32 compute path: tight check against the conv reference.
    out_f32 = jax.block_until_ready(
        mappingnet_forward(x, w1, b1, wenc, benc, layer,
                           compute_dtype=jnp.float32))
    np.testing.assert_allclose(np.asarray(out_f32), np.asarray(ref),
                               rtol=5e-4, atol=5e-5)

    # default bf16 MXU path: looser tolerance for input/weight rounding.
    out_bf16 = jax.block_until_ready(
        mappingnet_forward(x, w1, b1, wenc, benc, layer))
    np.testing.assert_allclose(np.asarray(out_bf16), np.asarray(ref),
                               rtol=2e-2, atol=2e-2)

    print("KERNEL_OK")
</pallas_src>

<mosaic_0001>
module attributes {stable_mosaic.version = 11 : i64} {
  func.func @mappingnet_kernel(%arg0: i32, %arg1: memref<2x32x8xf32, #tpu.memory_space<vmem>>, %arg2: memref<56x32xf32, #tpu.memory_space<vmem>>, %arg3: memref<1x32xf32, #tpu.memory_space<vmem>>, %arg4: memref<2x96x32xf32, #tpu.memory_space<vmem>>, %arg5: memref<2x1x32xf32, #tpu.memory_space<vmem>>, %arg6: memref<2x32xf32, #tpu.memory_space<vmem>>, %arg7: memref<64x56xf32, #tpu.memory_space<vmem>>, %arg8: memref<48x96xf32, #tpu.memory_space<vmem>>) attributes {dimension_semantics = [#tpu.dimension_semantics<arbitrary>], iteration_bounds = array<i64: 1>, scalar_prefetch = 0 : i64, scratch_operands = 2 : i64, tpu.core_type = #tpu.core_type<tc>, window_params = [{pipeline_mode = #tpu.pipeline_mode<synchronous>, transform_indices = @transform_0, window_bounds = array<i64: 2, 32, 8>}, {pipeline_mode = #tpu.pipeline_mode<synchronous>, transform_indices = @transform_1, window_bounds = array<i64: 56, 32>}, {pipeline_mode = #tpu.pipeline_mode<synchronous>, transform_indices = @transform_2, window_bounds = array<i64: 1, 32>}, {pipeline_mode = #tpu.pipeline_mode<synchronous>, transform_indices = @transform_3, window_bounds = array<i64: 2, 96, 32>}, {pipeline_mode = #tpu.pipeline_mode<synchronous>, transform_indices = @transform_4, window_bounds = array<i64: 2, 1, 32>}, {pipeline_mode = #tpu.pipeline_mode<synchronous>, transform_indices = @transform_5, window_bounds = array<i64: 2, 32>}]} {
    %c0 = arith.constant 0 : index
    %c0_0 = arith.constant 0 : index
    %c0_1 = arith.constant 0 : index
    %0 = vector.load %arg1[%c0, %c0_0, %c0_1] : memref<2x32x8xf32, #tpu.memory_space<vmem>>, vector<1x32x8xf32>
    %1 = vector.shape_cast %0 : vector<1x32x8xf32> to vector<32x8xf32>
    %2 = vector.extract_strided_slice %1 {offsets = [0, 0], sizes = [26, 8], strides = [1, 1]} : vector<32x8xf32> to vector<26x8xf32>
    %c0_2 = arith.constant 0 : index
    %c0_3 = arith.constant 0 : index
    %3 = vector.load %arg7[%c0_2, %c0_3] : memref<64x56xf32, #tpu.memory_space<vmem>>, vector<26x8xf32>
    tpu.vector_store %arg7[%c0_2, %c0_3], %2 {strides = array<i32>} : memref<64x56xf32, #tpu.memory_space<vmem>>, vector<26x8xf32>,
    %4 = vector.extract_strided_slice %1 {offsets = [1, 0], sizes = [26, 8], strides = [1, 1]} : vector<32x8xf32> to vector<26x8xf32>
    %c0_4 = arith.constant 0 : index
    %c8 = arith.constant 8 : index
    %5 = vector.load %arg7[%c0_4, %c8] : memref<64x56xf32, #tpu.memory_space<vmem>>, vector<26x8xf32>
    tpu.vector_store %arg7[%c0_4, %c8], %4 {strides = array<i32>} : memref<64x56xf32, #tpu.memory_space<vmem>>, vector<26x8xf32>,
    %6 = vector.extract_strided_slice %1 {offsets = [2, 0], sizes = [26, 8], strides = [1, 1]} : vector<32x8xf32> to vector<26x8xf32>
    %c0_5 = arith.constant 0 : index
    %c16 = arith.constant 16 : index
    %7 = vector.load %arg7[%c0_5, %c16] : memref<64x56xf32, #tpu.memory_space<vmem>>, vector<26x8xf32>
    tpu.vector_store %arg7[%c0_5, %c16], %6 {strides = array<i32>} : memref<64x56xf32, #tpu.memory_space<vmem>>, vector<26x8xf32>,
    %8 = vector.extract_strided_slice %1 {offsets = [3, 0], sizes = [26, 8], strides = [1, 1]} : vector<32x8xf32> to vector<26x8xf32>
    %c0_6 = arith.constant 0 : index
    %c24 = arith.constant 24 : index
    %9 = vector.load %arg7[%c0_6, %c24] : memref<64x56xf32, #tpu.memory_space<vmem>>, vector<26x8xf32>
    tpu.vector_store %arg7[%c0_6, %c24], %8 {strides = array<i32>} : memref<64x56xf32, #tpu.memory_space<vmem>>, vector<26x8xf32>,
    %10 = vector.extract_strided_slice %1 {offsets = [4, 0], sizes = [26, 8], strides = [1, 1]} : vector<32x8xf32> to vector<26x8xf32>
    %c0_7 = arith.constant 0 : index
    %c32 = arith.constant 32 : index
    %11 = vector.load %arg7[%c0_7, %c32] : memref<64x56xf32, #tpu.memory_space<vmem>>, vector<26x8xf32>
    tpu.vector_store %arg7[%c0_7, %c32], %10 {strides = array<i32>} : memref<64x56xf32, #tpu.memory_space<vmem>>, vector<26x8xf32>,
    %12 = vector.extract_strided_slice %1 {offsets = [5, 0], sizes = [26, 8], strides = [1, 1]} : vector<32x8xf32> to vector<26x8xf32>
    %c0_8 = arith.constant 0 : index
    %c40 = arith.constant 40 : index
    %13 = vector.load %arg7[%c0_8, %c40] : memref<64x56xf32, #tpu.memory_space<vmem>>, vector<26x8xf32>
    tpu.vector_store %arg7[%c0_8, %c40], %12 {strides = array<i32>} : memref<64x56xf32, #tpu.memory_space<vmem>>, vector<26x8xf32>,
    %14 = vector.extract_strided_slice %1 {offsets = [6, 0], sizes = [26, 8], strides = [1, 1]} : vector<32x8xf32> to vector<26x8xf32>
    %c0_9 = arith.constant 0 : index
    %c48 = arith.constant 48 : index
    %15 = vector.load %arg7[%c0_9, %c48] : memref<64x56xf32, #tpu.memory_space<vmem>>, vector<26x8xf32>
    tpu.vector_store %arg7[%c0_9, %c48], %14 {strides = array<i32>} : memref<64x56xf32, #tpu.memory_space<vmem>>, vector<26x8xf32>,
    %c1 = arith.constant 1 : index
    %c0_10 = arith.constant 0 : index
    %c0_11 = arith.constant 0 : index
    %16 = vector.load %arg1[%c1, %c0_10, %c0_11] : memref<2x32x8xf32, #tpu.memory_space<vmem>>, vector<1x32x8xf32>
    %17 = vector.shape_cast %16 : vector<1x32x8xf32> to vector<32x8xf32>
    %18 = vector.extract_strided_slice %17 {offsets = [0, 0], sizes = [26, 8], strides = [1, 1]} : vector<32x8xf32> to vector<26x8xf32>
    %c32_12 = arith.constant 32 : index
    %c0_13 = arith.constant 0 : index
    %19 = vector.load %arg7[%c32_12, %c0_13] : memref<64x56xf32, #tpu.memory_space<vmem>>, vector<26x8xf32>
    tpu.vector_store %arg7[%c32_12, %c0_13], %18 {strides = array<i32>} : memref<64x56xf32, #tpu.memory_space<vmem>>, vector<26x8xf32>,
    %20 = vector.extract_strided_slice %17 {offsets = [1, 0], sizes = [26, 8], strides = [1, 1]} : vector<32x8xf32> to vector<26x8xf32>
    %c32_14 = arith.constant 32 : index
    %c8_15 = arith.constant 8 : index
    %21 = vector.load %arg7[%c32_14, %c8_15] : memref<64x56xf32, #tpu.memory_space<vmem>>, vector<26x8xf32>
    tpu.vector_store %arg7[%c32_14, %c8_15], %20 {strides = array<i32>} : memref<64x56xf32, #tpu.memory_space<vmem>>, vector<26x8xf32>,
    %22 = vector.extract_strided_slice %17 {offsets = [2, 0], sizes = [26, 8], strides = [1, 1]} : vector<32x8xf32> to vector<26x8xf32>
    %c32_16 = arith.constant 32 : index
    %c16_17 = arith.constant 16 : index
    %23 = vector.load %arg7[%c32_16, %c16_17] : memref<64x56xf32, #tpu.memory_space<vmem>>, vector<26x8xf32>
    tpu.vector_store %arg7[%c32_16, %c16_17], %22 {strides = array<i32>} : memref<64x56xf32, #tpu.memory_space<vmem>>, vector<26x8xf32>,
    %24 = vector.extract_strided_slice %17 {offsets = [3, 0], sizes = [26, 8], strides = [1, 1]} : vector<32x8xf32> to vector<26x8xf32>
    %c32_18 = arith.constant 32 : index
    %c24_19 = arith.constant 24 : index
    %25 = vector.load %arg7[%c32_18, %c24_19] : memref<64x56xf32, #tpu.memory_space<vmem>>, vector<26x8xf32>
    tpu.vector_store %arg7[%c32_18, %c24_19], %24 {strides = array<i32>} : memref<64x56xf32, #tpu.memory_space<vmem>>, vector<26x8xf32>,
    %26 = vector.extract_strided_slice %17 {offsets = [4, 0], sizes = [26, 8], strides = [1, 1]} : vector<32x8xf32> to vector<26x8xf32>
    %c32_20 = arith.constant 32 : index
    %c32_21 = arith.constant 32 : index
    %27 = vector.load %arg7[%c32_20, %c32_21] : memref<64x56xf32, #tpu.memory_space<vmem>>, vector<26x8xf32>
    tpu.vector_store %arg7[%c32_20, %c32_21], %26 {strides = array<i32>} : memref<64x56xf32, #tpu.memory_space<vmem>>, vector<26x8xf32>,
    %28 = vector.extract_strided_slice %17 {offsets = [5, 0], sizes = [26, 8], strides = [1, 1]} : vector<32x8xf32> to vector<26x8xf32>
    %c32_22 = arith.constant 32 : index
    %c40_23 = arith.constant 40 : index
    %29 = vector.load %arg7[%c32_22, %c40_23] : memref<64x56xf32, #tpu.memory_space<vmem>>, vector<26x8xf32>
    tpu.vector_store %arg7[%c32_22, %c40_23], %28 {strides = array<i32>} : memref<64x56xf32, #tpu.memory_space<vmem>>, vector<26x8xf32>,
    %30 = vector.extract_strided_slice %17 {offsets = [6, 0], sizes = [26, 8], strides = [1, 1]} : vector<32x8xf32> to vector<26x8xf32>
    %c32_24 = arith.constant 32 : index
    %c48_25 = arith.constant 48 : index
    %31 = vector.load %arg7[%c32_24, %c48_25] : memref<64x56xf32, #tpu.memory_space<vmem>>, vector<26x8xf32>
    tpu.vector_store %arg7[%c32_24, %c48_25], %30 {strides = array<i32>} : memref<64x56xf32, #tpu.memory_space<vmem>>, vector<26x8xf32>,
    %c0_26 = arith.constant 0 : index
    %c0_27 = arith.constant 0 : index
    %32 = vector.load %arg7[%c0_26, %c0_27] : memref<64x56xf32, #tpu.memory_space<vmem>>, vector<64x56xf32>
    %c0_28 = arith.constant 0 : index
    %c0_29 = arith.constant 0 : index
    %33 = vector.load %arg2[%c0_28, %c0_29] : memref<56x32xf32, #tpu.memory_space<vmem>>, vector<56x32xf32>
    %cst = arith.constant dense<0.000000e+00> : vector<64x32xf32>
    %34 = tpu.matmul %32, %33, %cst {dimension_numbers = #tpu.dot_dimension_numbers<[1], [0], [0], [1], [0, 0, 1, 1], [], []>} : vector<64x56xf32>, vector<56x32xf32>, vector<64x32xf32> -> vector<64x32xf32>
    %c0_30 = arith.constant 0 : index
    %c0_31 = arith.constant 0 : index
    %35 = vector.load %arg3[%c0_30, %c0_31] : memref<1x32xf32, #tpu.memory_space<vmem>>, vector<1x32xf32>
    %36 = vector.broadcast %35 : vector<1x32xf32> to vector<64x32xf32>
    %37 = arith.addf %34, %36 : vector<64x32xf32>
    %38 = vector.extract_strided_slice %37 {offsets = [0, 0], sizes = [26, 32], strides = [1, 1]} : vector<64x32xf32> to vector<26x32xf32>
    %39 = vector.extract_strided_slice %37 {offsets = [32, 0], sizes = [26, 32], strides = [1, 1]} : vector<64x32xf32> to vector<26x32xf32>
    %cst_32 = arith.constant 0.000000e+00 : f32
    %40 = vector.broadcast %cst_32 : f32 to vector<26x32xf32>
    %41 = arith.cmpf oge, %38, %40 : vector<26x32xf32>
    %cst_33 = arith.constant 1.000000e-01 : f32
    %42 = vector.broadcast %cst_33 : f32 to vector<26x32xf32>
    %43 = arith.mulf %42, %38 : vector<26x32xf32>
    %44 = arith.select %41, %38, %43 : vector<26x32xi1>, vector<26x32xf32>
    %45 = vector.extract_strided_slice %44 {offsets = [0, 0], sizes = [20, 32], strides = [1, 1]} : vector<26x32xf32> to vector<20x32xf32>
    %c0_34 = arith.constant 0 : index
    %c0_35 = arith.constant 0 : index
    %46 = vector.load %arg8[%c0_34, %c0_35] : memref<48x96xf32, #tpu.memory_space<vmem>>, vector<20x32xf32>
    tpu.vector_store %arg8[%c0_34, %c0_35], %45 {strides = array<i32>} : memref<48x96xf32, #tpu.memory_space<vmem>>, vector<20x32xf32>,
    %47 = vector.extract_strided_slice %44 {offsets = [3, 0], sizes = [20, 32], strides = [1, 1]} : vector<26x32xf32> to vector<20x32xf32>
    %c0_36 = arith.constant 0 : index
    %c32_37 = arith.constant 32 : index
    %48 = vector.load %arg8[%c0_36, %c32_37] : memref<48x96xf32, #tpu.memory_space<vmem>>, vector<20x32xf32>
    tpu.vector_store %arg8[%c0_36, %c32_37], %47 {strides = array<i32>} : memref<48x96xf32, #tpu.memory_space<vmem>>, vector<20x32xf32>,
    %49 = vector.extract_strided_slice %44 {offsets = [6, 0], sizes = [20, 32], strides = [1, 1]} : vector<26x32xf32> to vector<20x32xf32>
    %c0_38 = arith.constant 0 : index
    %c64 = arith.constant 64 : index
    %50 = vector.load %arg8[%c0_38, %c64] : memref<48x96xf32, #tpu.memory_space<vmem>>, vector<20x32xf32>
    tpu.vector_store %arg8[%c0_38, %c64], %49 {strides = array<i32>} : memref<48x96xf32, #tpu.memory_space<vmem>>, vector<20x32xf32>,
    %cst_39 = arith.constant 0.000000e+00 : f32
    %51 = vector.broadcast %cst_39 : f32 to vector<26x32xf32>
    %52 = arith.cmpf oge, %39, %51 : vector<26x32xf32>
    %cst_40 = arith.constant 1.000000e-01 : f32
    %53 = vector.broadcast %cst_40 : f32 to vector<26x32xf32>
    %54 = arith.mulf %53, %39 : vector<26x32xf32>
    %55 = arith.select %52, %39, %54 : vector<26x32xi1>, vector<26x32xf32>
    %56 = vector.extract_strided_slice %55 {offsets = [0, 0], sizes = [20, 32], strides = [1, 1]} : vector<26x32xf32> to vector<20x32xf32>
    %c24_41 = arith.constant 24 : index
    %c0_42 = arith.constant 0 : index
    %57 = vector.load %arg8[%c24_41, %c0_42] : memref<48x96xf32, #tpu.memory_space<vmem>>, vector<20x32xf32>
    tpu.vector_store %arg8[%c24_41, %c0_42], %56 {strides = array<i32>} : memref<48x96xf32, #tpu.memory_space<vmem>>, vector<20x32xf32>,
    %58 = vector.extract_strided_slice %55 {offsets = [3, 0], sizes = [20, 32], strides = [1, 1]} : vector<26x32xf32> to vector<20x32xf32>
    %c24_43 = arith.constant 24 : index
    %c32_44 = arith.constant 32 : index
    %59 = vector.load %arg8[%c24_43, %c32_44] : memref<48x96xf32, #tpu.memory_space<vmem>>, vector<20x32xf32>
    tpu.vector_store %arg8[%c24_43, %c32_44], %58 {strides = array<i32>} : memref<48x96xf32, #tpu.memory_space<vmem>>, vector<20x32xf32>,
    %60 = vector.extract_strided_slice %55 {offsets = [6, 0], sizes = [20, 32], strides = [1, 1]} : vector<26x32xf32> to vector<20x32xf32>
    %c24_45 = arith.constant 24 : index
    %c64_46 = arith.constant 64 : index
    %61 = vector.load %arg8[%c24_45, %c64_46] : memref<48x96xf32, #tpu.memory_space<vmem>>, vector<20x32xf32>
    tpu.vector_store %arg8[%c24_45, %c64_46], %60 {strides = array<i32>} : memref<48x96xf32, #tpu.memory_space<vmem>>, vector<20x32xf32>,
    %c0_47 = arith.constant 0 : index
    %c0_48 = arith.constant 0 : index
    %62 = vector.load %arg8[%c0_47, %c0_48] : memref<48x96xf32, #tpu.memory_space<vmem>>, vector<48x96xf32>
    %c0_49 = arith.constant 0 : index
    %c0_50 = arith.constant 0 : index
    %c0_51 = arith.constant 0 : index
    %63 = vector.load %arg4[%c0_49, %c0_50, %c0_51] : memref<2x96x32xf32, #tpu.memory_space<vmem>>, vector<1x96x32xf32>
    %64 = vector.shape_cast %63 : vector<1x96x32xf32> to vector<96x32xf32>
    %cst_52 = arith.constant dense<0.000000e+00> : vector<48x32xf32>
    %65 = tpu.matmul %62, %64, %cst_52 {dimension_numbers = #tpu.dot_dimension_numbers<[1], [0], [0], [1], [0, 0, 1, 1], [], []>} : vector<48x96xf32>, vector<96x32xf32>, vector<48x32xf32> -> vector<48x32xf32>
    %c0_53 = arith.constant 0 : index
    %c0_54 = arith.constant 0 : index
    %c0_55 = arith.constant 0 : index
    %66 = vector.load %arg5[%c0_53, %c0_54, %c0_55] : memref<2x1x32xf32, #tpu.memory_space<vmem>>, vector<1x1x32xf32>
    %67 = vector.shape_cast %66 : vector<1x1x32xf32> to vector<1x32xf32>
    %68 = vector.broadcast %67 : vector<1x32xf32> to vector<48x32xf32>
    %69 = arith.addf %65, %68 : vector<48x32xf32>
    %70 = vector.extract_strided_slice %69 {offsets = [0, 0], sizes = [20, 32], strides = [1, 1]} : vector<48x32xf32> to vector<20x32xf32>
    %71 = vector.extract_strided_slice %38 {offsets = [3, 0], sizes = [20, 32], strides = [1, 1]} : vector<26x32xf32> to vector<20x32xf32>
    %72 = arith.addf %70, %71 : vector<20x32xf32>
    %73 = vector.extract_strided_slice %69 {offsets = [24, 0], sizes = [20, 32], strides = [1, 1]} : vector<48x32xf32> to vector<20x32xf32>
    %74 = vector.extract_strided_slice %39 {offsets = [3, 0], sizes = [20, 32], strides = [1, 1]} : vector<26x32xf32> to vector<20x32xf32>
    %75 = arith.addf %73, %74 : vector<20x32xf32>
    %cst_56 = arith.constant 0.000000e+00 : f32
    %76 = vector.broadcast %cst_56 : f32 to vector<20x32xf32>
    %77 = arith.cmpf oge, %72, %76 : vector<20x32xf32>
    %cst_57 = arith.constant 1.000000e-01 : f32
    %78 = vector.broadcast %cst_57 : f32 to vector<20x32xf32>
    %79 = arith.mulf %78, %72 : vector<20x32xf32>
    %80 = arith.select %77, %72, %79 : vector<20x32xi1>, vector<20x32xf32>
    %81 = vector.extract_strided_slice %80 {offsets = [0, 0], sizes = [14, 32], strides = [1, 1]} : vector<20x32xf32> to vector<14x32xf32>
    %c0_58 = arith.constant 0 : index
    %c0_59 = arith.constant 0 : index
    %82 = vector.load %arg8[%c0_58, %c0_59] : memref<48x96xf32, #tpu.memory_space<vmem>>, vector<14x32xf32>
    tpu.vector_store %arg8[%c0_58, %c0_59], %81 {strides = array<i32>} : memref<48x96xf32, #tpu.memory_space<vmem>>, vector<14x32xf32>,
    %83 = vector.extract_strided_slice %80 {offsets = [3, 0], sizes = [14, 32], strides = [1, 1]} : vector<20x32xf32> to vector<14x32xf32>
    %c0_60 = arith.constant 0 : index
    %c32_61 = arith.constant 32 : index
    %84 = vector.load %arg8[%c0_60, %c32_61] : memref<48x96xf32, #tpu.memory_space<vmem>>, vector<14x32xf32>
    tpu.vector_store %arg8[%c0_60, %c32_61], %83 {strides = array<i32>} : memref<48x96xf32, #tpu.memory_space<vmem>>, vector<14x32xf32>,
    %85 = vector.extract_strided_slice %80 {offsets = [6, 0], sizes = [14, 32], strides = [1, 1]} : vector<20x32xf32> to vector<14x32xf32>
    %c0_62 = arith.constant 0 : index
    %c64_63 = arith.constant 64 : index
    %86 = vector.load %arg8[%c0_62, %c64_63] : memref<48x96xf32, #tpu.memory_space<vmem>>, vector<14x32xf32>
    tpu.vector_store %arg8[%c0_62, %c64_63], %85 {strides = array<i32>} : memref<48x96xf32, #tpu.memory_space<vmem>>, vector<14x32xf32>,
    %cst_64 = arith.constant 0.000000e+00 : f32
    %87 = vector.broadcast %cst_64 : f32 to vector<20x32xf32>
    %88 = arith.cmpf oge, %75, %87 : vector<20x32xf32>
    %cst_65 = arith.constant 1.000000e-01 : f32
    %89 = vector.broadcast %cst_65 : f32 to vector<20x32xf32>
    %90 = arith.mulf %89, %75 : vector<20x32xf32>
    %91 = arith.select %88, %75, %90 : vector<20x32xi1>, vector<20x32xf32>
    %92 = vector.extract_strided_slice %91 {offsets = [0, 0], sizes = [14, 32], strides = [1, 1]} : vector<20x32xf32> to vector<14x32xf32>
    %c16_66 = arith.constant 16 : index
    %c0_67 = arith.constant 0 : index
    %93 = vector.load %arg8[%c16_66, %c0_67] : memref<48x96xf32, #tpu.memory_space<vmem>>, vector<14x32xf32>
    tpu.vector_store %arg8[%c16_66, %c0_67], %92 {strides = array<i32>} : memref<48x96xf32, #tpu.memory_space<vmem>>, vector<14x32xf32>,
    %94 = vector.extract_strided_slice %91 {offsets = [3, 0], sizes = [14, 32], strides = [1, 1]} : vector<20x32xf32> to vector<14x32xf32>
    %c16_68 = arith.constant 16 : index
    %c32_69 = arith.constant 32 : index
    %95 = vector.load %arg8[%c16_68, %c32_69] : memref<48x96xf32, #tpu.memory_space<vmem>>, vector<14x32xf32>
    tpu.vector_store %arg8[%c16_68, %c32_69], %94 {strides = array<i32>} : memref<48x96xf32, #tpu.memory_space<vmem>>, vector<14x32xf32>,
    %96 = vector.extract_strided_slice %91 {offsets = [6, 0], sizes = [14, 32], strides = [1, 1]} : vector<20x32xf32> to vector<14x32xf32>
    %c16_70 = arith.constant 16 : index
    %c64_71 = arith.constant 64 : index
    %97 = vector.load %arg8[%c16_70, %c64_71] : memref<48x96xf32, #tpu.memory_space<vmem>>, vector<14x32xf32>
    tpu.vector_store %arg8[%c16_70, %c64_71], %96 {strides = array<i32>} : memref<48x96xf32, #tpu.memory_space<vmem>>, vector<14x32xf32>,
    %c0_72 = arith.constant 0 : index
    %c0_73 = arith.constant 0 : index
    %98 = vector.load %arg8[%c0_72, %c0_73] : memref<48x96xf32, #tpu.memory_space<vmem>>, vector<32x96xf32>
    %c1_74 = arith.constant 1 : index
    %c0_75 = arith.constant 0 : index
    %c0_76 = arith.constant 0 : index
    %99 = vector.load %arg4[%c1_74, %c0_75, %c0_76] : memref<2x96x32xf32, #tpu.memory_space<vmem>>, vector<1x96x32xf32>
    %100 = vector.shape_cast %99 : vector<1x96x32xf32> to vector<96x32xf32>
    %cst_77 = arith.constant dense<0.000000e+00> : vector<32x32xf32>
    %101 = tpu.matmul %98, %100, %cst_77 {dimension_numbers = #tpu.dot_dimension_numbers<[1], [0], [0], [1], [0, 0, 1, 1], [], []>} : vector<32x96xf32>, vector<96x32xf32>, vector<32x32xf32> -> vector<32x32xf32>
    %c1_78 = arith.constant 1 : index
    %c0_79 = arith.constant 0 : index
    %c0_80 = arith.constant 0 : index
    %102 = vector.load %arg5[%c1_78, %c0_79, %c0_80] : memref<2x1x32xf32, #tpu.memory_space<vmem>>, vector<1x1x32xf32>
    %103 = vector.shape_cast %102 : vector<1x1x32xf32> to vector<1x32xf32>
    %104 = vector.broadcast %103 : vector<1x32xf32> to vector<32x32xf32>
    %105 = arith.addf %101, %104 : vector<32x32xf32>
    %106 = vector.extract_strided_slice %105 {offsets = [0, 0], sizes = [14, 32], strides = [1, 1]} : vector<32x32xf32> to vector<14x32xf32>
    %107 = vector.extract_strided_slice %72 {offsets = [3, 0], sizes = [14, 32], strides = [1, 1]} : vector<20x32xf32> to vector<14x32xf32>
    %108 = arith.addf %106, %107 : vector<14x32xf32>
    %109 = vector.extract_strided_slice %105 {offsets = [16, 0], sizes = [14, 32], strides = [1, 1]} : vector<32x32xf32> to vector<14x32xf32>
    %110 = vector.extract_strided_slice %75 {offsets = [3, 0], sizes = [14, 32], strides = [1, 1]} : vector<20x32xf32> to vector<14x32xf32>
    %111 = arith.addf %109, %110 : vector<14x32xf32>
    %cst_81 = arith.constant dense<0.000000e+00> : vector<32xf32>
    %112 = vector.multi_reduction <add>, %108, %cst_81 [0] : vector<14x32xf32> to vector<32xf32>
    %113 = vector.shape_cast %112 : vector<32xf32> to vector<1x32xf32>
    %cst_82 = arith.constant 1.400000e+01 : f32
    %114 = vector.broadcast %cst_82 : f32 to vector<1x32xf32>
    %115 = arith.divf %113, %114 : vector<1x32xf32>
    %cst_83 = arith.constant dense<0.000000e+00> : vector<32xf32>
    %116 = vector.multi_reduction <add>, %111, %cst_83 [0] : vector<14x32xf32> to vector<32xf32>
    %117 = vector.shape_cast %116 : vector<32xf32> to vector<1x32xf32>
    %cst_84 = arith.constant 1.400000e+01 : f32
    %118 = vector.broadcast %cst_84 : f32 to vector<1x32xf32>
    %119 = arith.divf %117, %118 : vector<1x32xf32>
    %120 = tpu.concatenate %115, %119 in 0 : vector<1x32xf32>, vector<1x32xf32> -> vector<2x32xf32>
    %c0_85 = arith.constant 0 : index
    %c0_86 = arith.constant 0 : index
    %121 = vector.load %arg6[%c0_85, %c0_86] : memref<2x32xf32, #tpu.memory_space<vmem>>, vector<2x32xf32>
    tpu.vector_store %arg6[%c0_85, %c0_86], %120 {strides = array<i32>} : memref<2x32xf32, #tpu.memory_space<vmem>>, vector<2x32xf32>,
    return
  }
  func.func @transform_0(%arg0: i32) -> (i32, i32, i32) {
    %c0_i32 = arith.constant 0 : i32
    %c0_i32_0 = arith.constant 0 : i32
    %c0_i32_1 = arith.constant 0 : i32
    %c0_i32_2 = arith.constant 0 : i32
    return %c0_i32, %c0_i32_0, %c0_i32_1 : i32, i32, i32
  }
  func.func @transform_1(%arg0: i32) -> (i32, i32) {
    %c0_i32 = arith.constant 0 : i32
    %c0_i32_0 = arith.constant 0 : i32
    %c0_i32_1 = arith.constant 0 : i32
    return %c0_i32, %c0_i32_0 : i32, i32
  }
  func.func @transform_2(%arg0: i32) -> (i32, i32) {
    %c0_i32 = arith.constant 0 : i32
    %c0_i32_0 = arith.constant 0 : i32
    %c0_i32_1 = arith.constant 0 : i32
    return %c0_i32, %c0_i32_0 : i32, i32
  }
  func.func @transform_3(%arg0: i32) -> (i32, i32, i32) {
    %c0_i32 = arith.constant 0 : i32
    %c0_i32_0 = arith.constant 0 : i32
    %c0_i32_1 = arith.constant 0 : i32
    %c0_i32_2 = arith.constant 0 : i32
    return %c0_i32, %c0_i32_0, %c0_i32_1 : i32, i32, i32
  }
  func.func @transform_4(%arg0: i32) -> (i32, i32, i32) {
    %c0_i32 = arith.constant 0 : i32
    %c0_i32_0 = arith.constant 0 : i32
    %c0_i32_1 = arith.constant 0 : i32
    %c0_i32_2 = arith.constant 0 : i32
    return %c0_i32, %c0_i32_0, %c0_i32_1 : i32, i32, i32
  }
  func.func @transform_5(%arg0: i32) -> (i32, i32) {
    %c0_i32 = arith.constant 0 : i32
    %c0_i32_0 = arith.constant 0 : i32
    %c0_i32_1 = arith.constant 0 : i32
    return %c0_i32, %c0_i32_0 : i32, i32
  }
}

</mosaic_0001>

<llo_original>
// kernel: tpu_custom_call.1
$region0: #{tpu_custom_call.1}
  #allocation0 [shape = 'u32[]', space=smem, size = 0x4, offset = 0x4, fixed_abs, tag = 'smem constant byte address 0x4 - core index']
  #allocation1 [shape = 'u32[144,128]{1,0:T(1,128)}', space=vmem, size = 0x12000, scoped, tag = 'internal scratch']
  #allocation2 [shape = 'f32[64,56]{1,0:T(8,128)}', space=vmem, size = 0x8000, scoped, tag = 'scratch operand']
  #allocation3 [shape = 'f32[48,96]{1,0:T(8,128)}', space=vmem, size = 0x6000, scoped, tag = 'scratch operand']
  %s0 = inlined_call_operand.vmem [shape: f32[2,32,8], index: 0, kind: input, shape index: {}]
  %s1 = inlined_call_operand.vmem [shape: f32[56,32], index: 1, kind: input, shape index: {}]
  %s2 = inlined_call_operand.vmem [shape: f32[1,32], index: 2, kind: input, shape index: {}]
  %s3 = inlined_call_operand.vmem [shape: f32[2,96,32], index: 3, kind: input, shape index: {}]
  %s4 = inlined_call_operand.vmem [shape: f32[2,1,32], index: 4, kind: input, shape index: {}]
  %s5 = inlined_call_operand.hbm [shape: f32[2,32], index: 5, kind: output, shape index: {}]
  %s6 = sld [smem:[#allocation0]]
  $region30: #{tpu_custom_call.1} parent=0
    _
  %s8 = ssub.s32 1, %s6
  %s9 = scalar_select 0, %s8, %s6
  $region1: #{tpu_custom_call.1} parent=0
    #allocation4 [shape = 'u8[1024]{0}', space=vmem, size = 0x400, scoped, tag = 'output window, operand 0, single buffered']
    #allocation5 [shape = 's32[1]{0}', space=sflag, size = 0x4, scoped, tag = 'scoped memory for tpu_custom_call.1']
    %10 = vsyncpa [#allocation5], 0
    // Predicated region
    $region2: #{tpu_custom_call.1} parent=1 // pred_check
      _
    $region3: #{tpu_custom_call.1} parent=1 // pred_check_branch
      %12 = sbr.rel (0) target = $region5
    $region4: #{tpu_custom_call.1} parent=1 // pred_region
      _
    $region5: #{tpu_custom_call.1} parent=1 // pred_fallthru
      _
    // Predicated region
    $region6: #{tpu_custom_call.1} parent=1 // pred_check
      _
    $region7: #{tpu_custom_call.1} parent=1 // pred_check_branch
      %14 = sbr.rel (0) target = $region9
    $region8: #{tpu_custom_call.1} parent=1 // pred_region
      _
    $region9: #{tpu_custom_call.1} parent=1 // pred_fallthru
      _
    // Predicated region
    $region10: #{tpu_custom_call.1} parent=1 // pred_check
      _
    $region11: #{tpu_custom_call.1} parent=1 // pred_check_branch
      %16 = sbr.rel (0) target = $region13
    $region12: #{tpu_custom_call.1} parent=1 // pred_region
      _
    $region13: #{tpu_custom_call.1} parent=1 // pred_fallthru
      _
    // Predicated region
    $region14: #{tpu_custom_call.1} parent=1 // pred_check
      _
    $region15: #{tpu_custom_call.1} parent=1 // pred_check_branch
      %18 = sbr.rel (0) target = $region17
    $region16: #{tpu_custom_call.1} parent=1 // pred_region
      _
    $region17: #{tpu_custom_call.1} parent=1 // pred_fallthru
      _
    // Predicated region
    $region18: #{tpu_custom_call.1} parent=1 // pred_check
      _
    $region19: #{tpu_custom_call.1} parent=1 // pred_check_branch
      %20 = sbr.rel (0) target = $region21
    $region20: #{tpu_custom_call.1} parent=1 // pred_region
      _
    $region21: #{tpu_custom_call.1} parent=1 // pred_fallthru
      _
    %v21 = vld [vmem:[%s0] sm:$0xff]
    %v22 = vld [vmem:[%s0 + $0x8] sm:$0xff]
    %v23 = vld [vmem:[%s0 + $0x10] sm:$0xff]
    %v24 = vld [vmem:[%s0 + $0x18] sm:$0xff]
    %vm25 = vcmask 64512
    %26 = vst.msk [vmem:[#allocation2] sm:$0xff] %vm25, %v21
    %27 = vst.msk [vmem:[#allocation2 + $0x8] sm:$0xff] %vm25, %v22
    %28 = vst.msk [vmem:[#allocation2 + $0x10] sm:$0xff] %vm25, %v23
    %vm29 = vcmask 58368
    %30 = vst.msk [vmem:[#allocation2 + $0x18] sm:$0x3] %vm29, %v24
    %35 = vrot.lane.b32.xlu0 %v21, 8
    %v36 = vpop.permute.xlu0 %35
    %37 = vrot.lane.b32.xlu0 %v22, 8
    %v38 = vpop.permute.xlu0 %37
    %39 = vrot.lane.b32.xlu0 %v23, 8
    %v40 = vpop.permute.xlu0 %39
    %41 = vrot.lane.b32.xlu0 %v24, 8
    %v42 = vpop.permute.xlu0 %41
    %vm47 = vcmask 130113
    %48 = vst.msk [vmem:[#allocation2 - $0x1] sm:$0xfe] %vm47, %v36
    %vm49 = vcmask 130112
    %50 = vst.msk [vmem:[#allocation2 + $0x7] sm:$0xff] %vm49, %v38
    %51 = vst.msk [vmem:[#allocation2 + $0xf] sm:$0xff] %vm49, %v40
    %vm52 = vcmask 124992
    %53 = vst.msk [vmem:[#allocation2 + $0x17] sm:$0x7] %vm52, %v42
    %54 = vrot.lane.b32.xlu0 %v21, 16
    %v55 = vpop.permute.xlu0 %54
    %56 = vrot.lane.b32.xlu0 %v22, 16
    %v57 = vpop.permute.xlu0 %56
    %58 = vrot.lane.b32.xlu0 %v23, 16
    %v59 = vpop.permute.xlu0 %58
    %60 = vrot.lane.b32.xlu0 %v24, 16
    %v61 = vpop.permute.xlu0 %60
    %vm66 = vcmask 195714
    %67 = vst.msk [vmem:[#allocation2 - $0x2] sm:$0xfc] %vm66, %v55
    %vm68 = vcmask 195712
    %69 = vst.msk [vmem:[#allocation2 + $0x6] sm:$0xff] %vm68, %v57
    %70 = vst.msk [vmem:[#allocation2 + $0xe] sm:$0xff] %vm68, %v59
    %vm71 = vcmask 191616
    %72 = vst.msk [vmem:[#allocation2 + $0x16] sm:$0xf] %vm71, %v61
    %73 = vrot.lane.b32.xlu0 %v21, 24
    %v74 = vpop.permute.xlu0 %73
    %75 = vrot.lane.b32.xlu0 %v22, 24
    %v76 = vpop.permute.xlu0 %75
    %77 = vrot.lane.b32.xlu0 %v23, 24
    %v78 = vpop.permute.xlu0 %77
    %79 = vrot.lane.b32.xlu0 %v24, 24
    %v80 = vpop.permute.xlu0 %79
    %vm85 = vcmask 261315
    %86 = vst.msk [vmem:[#allocation2 - $0x3] sm:$0xf8] %vm85, %v74
    %vm87 = vcmask 261312
    %88 = vst.msk [vmem:[#allocation2 + $0x5] sm:$0xff] %vm87, %v76
    %89 = vst.msk [vmem:[#allocation2 + $0xd] sm:$0xff] %vm87, %v78
    %vm90 = vcmask 258240
    %91 = vst.msk [vmem:[#allocation2 + $0x15] sm:$0x1f] %vm90, %v80
    %92 = vrot.lane.b32.xlu0 %v21, 32
    %v93 = vpop.permute.xlu0 %92
    %94 = vrot.lane.b32.xlu0 %v22, 32
    %v95 = vpop.permute.xlu0 %94
    %96 = vrot.lane.b32.xlu0 %v23, 32
    %v97 = vpop.permute.xlu0 %96
    %98 = vrot.lane.b32.xlu0 %v24, 32
    %v99 = vpop.permute.xlu0 %98
    %vm104 = vcmask 326916
    %105 = vst.msk [vmem:[#allocation2 - $0x4] sm:$0xf0] %vm104, %v93
    %vm106 = vcmask 326912
    %107 = vst.msk [vmem:[#allocation2 + $0x4] sm:$0xff] %vm106, %v95
    %108 = vst.msk [vmem:[#allocation2 + $0xc] sm:$0xff] %vm106, %v97
    %vm109 = vcmask 324864
    %110 = vst.msk [vmem:[#allocation2 + $0x14] sm:$0x3f] %vm109, %v99
    %111 = vrot.lane.b32.xlu0 %v21, 40
    %v112 = vpop.permute.xlu0 %111
    %113 = vrot.lane.b32.xlu0 %v22, 40
    %v114 = vpop.permute.xlu0 %113
    %115 = vrot.lane.b32.xlu0 %v23, 40
    %v116 = vpop.permute.xlu0 %115
    %117 = vrot.lane.b32.xlu0 %v24, 40
    %v118 = vpop.permute.xlu0 %117
    %vm123 = vcmask 392517
    %124 = vst.msk [vmem:[#allocation2 - $0x5] sm:$0xe0] %vm123, %v112
    %vm125 = vcmask 392512
    %126 = vst.msk [vmem:[#allocation2 + $0x3] sm:$0xff] %vm125, %v114
    %127 = vst.msk [vmem:[#allocation2 + $0xb] sm:$0xff] %vm125, %v116
    %vm128 = vcmask 391488
    %129 = vst.msk [vmem:[#allocation2 + $0x13] sm:$0x7f] %vm128, %v118
    %130 = vrot.lane.b32.xlu0 %v21, 48
    %v131 = vpop.permute.xlu0 %130
    %132 = vrot.lane.b32.xlu0 %v22, 48
    %v133 = vpop.permute.xlu0 %132
    %134 = vrot.lane.b32.xlu0 %v23, 48
    %v135 = vpop.permute.xlu0 %134
    %136 = vrot.lane.b32.xlu0 %v24, 48
    %v137 = vpop.permute.xlu0 %136
    %vm142 = vcmask 458118
    %143 = vst.msk [vmem:[#allocation2 - $0x6] sm:$0xc0] %vm142, %v131
    %vm144 = vcmask 458112
    %145 = vst.msk [vmem:[#allocation2 + $0x2] sm:$0xff] %vm144, %v133
    %146 = vst.msk [vmem:[#allocation2 + $0xa] sm:$0xff] %vm144, %v135
    %147 = vst.msk [vmem:[#allocation2 + $0x12] sm:$0xff] %vm144, %v137
    %s148 = scalar_lea.vmem %s0, 32
    %v149 = vld [vmem:[%s148] sm:$0xff]
    %v150 = vld [vmem:[%s148 + $0x8] sm:$0xff]
    %v151 = vld [vmem:[%s148 + $0x10] sm:$0xff]
    %v152 = vld [vmem:[%s148 + $0x18] sm:$0xff]
    %153 = vst.msk [vmem:[#allocation2 + $0x20] sm:$0xff] %vm25, %v149
    %154 = vst.msk [vmem:[#allocation2 + $0x28] sm:$0xff] %vm25, %v150
    %155 = vst.msk [vmem:[#allocation2 + $0x30] sm:$0xff] %vm25, %v151
    %156 = vst.msk [vmem:[#allocation2 + $0x38] sm:$0x3] %vm29, %v152
    %161 = vrot.lane.b32.xlu0 %v149, 8
    %v162 = vpop.permute.xlu0 %161
    %163 = vrot.lane.b32.xlu0 %v150, 8
    %v164 = vpop.permute.xlu0 %163
    %165 = vrot.lane.b32.xlu0 %v151, 8
    %v166 = vpop.permute.xlu0 %165
    %167 = vrot.lane.b32.xlu0 %v152, 8
    %v168 = vpop.permute.xlu0 %167
    %173 = vst.msk [vmem:[#allocation2 + $0x1f] sm:$0xfe] %vm47, %v162
    %174 = vst.msk [vmem:[#allocation2 + $0x27] sm:$0xff] %vm49, %v164
    %175 = vst.msk [vmem:[#allocation2 + $0x2f] sm:$0xff] %vm49, %v166
    %176 = vst.msk [vmem:[#allocation2 + $0x37] sm:$0x7] %vm52, %v168
    %177 = vrot.lane.b32.xlu0 %v149, 16
    %v178 = vpop.permute.xlu0 %177
    %179 = vrot.lane.b32.xlu0 %v150, 16
    %v180 = vpop.permute.xlu0 %179
    %181 = vrot.lane.b32.xlu0 %v151, 16
    %v182 = vpop.permute.xlu0 %181
    %183 = vrot.lane.b32.xlu0 %v152, 16
    %v184 = vpop.permute.xlu0 %183
    %189 = vst.msk [vmem:[#allocation2 + $0x1e] sm:$0xfc] %vm66, %v178
    %190 = vst.msk [vmem:[#allocation2 + $0x26] sm:$0xff] %vm68, %v180
    %191 = vst.msk [vmem:[#allocation2 + $0x2e] sm:$0xff] %vm68, %v182
    %192 = vst.msk [vmem:[#allocation2 + $0x36] sm:$0xf] %vm71, %v184
    %193 = vrot.lane.b32.xlu0 %v149, 24
    %v194 = vpop.permute.xlu0 %193
    %195 = vrot.lane.b32.xlu0 %v150, 24
    %v196 = vpop.permute.xlu0 %195
    %197 = vrot.lane.b32.xlu0 %v151, 24
    %v198 = vpop.permute.xlu0 %197
    %199 = vrot.lane.b32.xlu0 %v152, 24
    %v200 = vpop.permute.xlu0 %199
    %205 = vst.msk [vmem:[#allocation2 + $0x1d] sm:$0xf8] %vm85, %v194
    %206 = vst.msk [vmem:[#allocation2 + $0x25] sm:$0xff] %vm87, %v196
    %207 = vst.msk [vmem:[#allocation2 + $0x2d] sm:$0xff] %vm87, %v198
    %208 = vst.msk [vmem:[#allocation2 + $0x35] sm:$0x1f] %vm90, %v200
    %209 = vrot.lane.b32.xlu0 %v149, 32
    %v210 = vpop.permute.xlu0 %209
    %211 = vrot.lane.b32.xlu0 %v150, 32
    %v212 = vpop.permute.xlu0 %211
    %213 = vrot.lane.b32.xlu0 %v151, 32
    %v214 = vpop.permute.xlu0 %213
    %215 = vrot.lane.b32.xlu0 %v152, 32
    %v216 = vpop.permute.xlu0 %215
    %221 = vst.msk [vmem:[#allocation2 + $0x1c] sm:$0xf0] %vm104, %v210
    %222 = vst.msk [vmem:[#allocation2 + $0x24] sm:$0xff] %vm106, %v212
    %223 = vst.msk [vmem:[#allocation2 + $0x2c] sm:$0xff] %vm106, %v214
    %224 = vst.msk [vmem:[#allocation2 + $0x34] sm:$0x3f] %vm109, %v216
    %225 = vrot.lane.b32.xlu0 %v149, 40
    %v226 = vpop.permute.xlu0 %225
    %227 = vrot.lane.b32.xlu0 %v150, 40
    %v228 = vpop.permute.xlu0 %227
    %229 = vrot.lane.b32.xlu0 %v151, 40
    %v230 = vpop.permute.xlu0 %229
    %231 = vrot.lane.b32.xlu0 %v152, 40
    %v232 = vpop.permute.xlu0 %231
    %237 = vst.msk [vmem:[#allocation2 + $0x1b] sm:$0xe0] %vm123, %v226
    %238 = vst.msk [vmem:[#allocation2 + $0x23] sm:$0xff] %vm125, %v228
    %239 = vst.msk [vmem:[#allocation2 + $0x2b] sm:$0xff] %vm125, %v230
    %240 = vst.msk [vmem:[#allocation2 + $0x33] sm:$0x7f] %vm128, %v232
    %241 = vrot.lane.b32.xlu0 %v149, 48
    %v242 = vpop.permute.xlu0 %241
    %243 = vrot.lane.b32.xlu0 %v150, 48
    %v244 = vpop.permute.xlu0 %243
    %245 = vrot.lane.b32.xlu0 %v151, 48
    %v246 = vpop.permute.xlu0 %245
    %247 = vrot.lane.b32.xlu0 %v152, 48
    %v248 = vpop.permute.xlu0 %247
    %253 = vst.msk [vmem:[#allocation2 + $0x1a] sm:$0xc0] %vm142, %v242
    %254 = vst.msk [vmem:[#allocation2 + $0x22] sm:$0xff] %vm144, %v244
    %255 = vst.msk [vmem:[#allocation2 + $0x2a] sm:$0xff] %vm144, %v246
    %256 = vst.msk [vmem:[#allocation2 + $0x32] sm:$0xff] %vm144, %v248
    %v257 = vld [vmem:[#allocation2] sm:$0xff]
    %v258 = vld [vmem:[#allocation2 + $0x8] sm:$0xff]
    %v259 = vld [vmem:[#allocation2 + $0x10] sm:$0xff]
    %v260 = vld [vmem:[#allocation2 + $0x18] sm:$0xff]
    %v261 = vld [vmem:[#allocation2 + $0x20] sm:$0xff]
    %v262 = vld [vmem:[#allocation2 + $0x28] sm:$0xff]
    %v263 = vld [vmem:[#allocation2 + $0x30] sm:$0xff]
    %v264 = vld [vmem:[#allocation2 + $0x38] sm:$0xff]
    %v265 = vld [vmem:[%s1] sm:$0xff]
    %v266 = vld [vmem:[%s1 + $0x8] sm:$0xff]
    %v267 = vld [vmem:[%s1 + $0x10] sm:$0xff]
    %v268 = vld [vmem:[%s1 + $0x18] sm:$0xff]
    %v269 = vld [vmem:[%s1 + $0x20] sm:$0xff]
    %v270 = vld [vmem:[%s1 + $0x28] sm:$0xff]
    %v271 = vld [vmem:[%s1 + $0x30] sm:$0xff]
    %v272 = vld [vmem:[%s2] sm:$0x1]
    %v274 = vlaneseq
    %v275 = vshrl.u32 %v274, 7
    %v276 = vsub.s32 0, %v275
    %v277 = vrot.slane %v272, %v276
    %vm279 = vcmask 457728
    %v281 = vsel %vm279, %v257, 0
    %v284 = vsel %vm279, %v258, 0
    %v287 = vsel %vm279, %v259, 0
    %v290 = vsel %vm279, %v260, 0
    %v293 = vsel %vm279, %v261, 0
    %v296 = vsel %vm279, %v262, 0
    %v299 = vsel %vm279, %v263, 0
    %v302 = vsel %vm279, %v264, 0
    %304 = vmatprep.subr.mxu0 0.0
    %305 = vmatpush1.msra.mxu0 %v265
    %306 = vmatprep.subr.mxu0 0.0
    %307 = vmatpush1.msra.mxu0 %v266
    %308 = vmatprep.subr.mxu0 0.0
    %309 = vmatpush1.msra.mxu0 %v267
    %310 = vmatprep.subr.mxu0 0.0
    %311 = vmatpush1.msra.mxu0 %v268
    %312 = vmatprep.subr.mxu0 0.0
    %313 = vmatpush1.msra.mxu0 %v269
    %314 = vmatprep.subr.mxu0 0.0
    %315 = vmatpush1.msra.mxu0 %v270
    %316 = vmatprep.subr.mxu0 0.0
    %317 = vmatpush1.msra.mxu0 %v271
    %318 = vmatprep.subr.mxu0 0.0
    %319 = vmatpush1.msra.mxu0 0.0
    %320 = vmatprep.subr.mxu0 0.0
    %321 = vmatpush1.msra.mxu0 0.0
    %322 = vmatprep.subr.mxu0 0.0
    %323 = vmatpush1.msra.mxu0 0.0
    %324 = vmatprep.subr.mxu0 0.0
    %325 = vmatpush1.msra.mxu0 0.0
    %326 = vmatprep.subr.mxu0 0.0
    %327 = vmatpush1.msra.mxu0 0.0
    %328 = vmatprep.subr.mxu0 0.0
    %329 = vmatpush1.msra.mxu0 0.0
    %330 = vmatprep.subr.mxu0 0.0
    %331 = vmatpush1.msra.mxu0 0.0
    %332 = vmatprep.subr.mxu0 0.0
    %333 = vmatpush1.msra.mxu0 0.0
    %334 = vmatprep.subr.mxu0 0.0
    %335 = vmatpush1.msra.mxu0 0.0
    %336 = vmatprep.subr.mxu0 0.0
    %337 = vmatpush1.msra.mxu0 0.0
    %338 = vmatprep.subr.mxu0 0.0
    %339 = vmatpush1.msra.mxu0 0.0
    %340 = vmatprep.subr.mxu0 0.0
    %341 = vmatpush1.msra.mxu0 0.0
    %342 = vmatprep.subr.mxu0 0.0
    %343 = vmatpush1.msra.mxu0 0.0
    %344 = vmatprep.subr.mxu0 0.0
    %345 = vmatpush1.msra.mxu0 0.0
    %346 = vmatprep.subr.mxu0 0.0
    %347 = vmatpush1.msra.mxu0 0.0
    %348 = vmatprep.subr.mxu0 0.0
    %349 = vmatpush1.msra.mxu0 0.0
    %350 = vmatprep.subr.mxu0 0.0
    %351 = vmatpush1.msra.mxu0 0.0
    %352 = vmatprep.subr.mxu0 0.0
    %353 = vmatpush1.msra.mxu0 0.0
    %354 = vmatprep.subr.mxu0 0.0
    %355 = vmatpush1.msra.mxu0 0.0
    %356 = vmatprep.subr.mxu0 0.0
    %357 = vmatpush1.msra.mxu0 0.0
    %358 = vmatprep.subr.mxu0 0.0
    %359 = vmatpush1.msra.mxu0 0.0
    %360 = vmatprep.subr.mxu0 0.0
    %361 = vmatpush1.msra.mxu0 0.0
    %362 = vmatprep.subr.mxu0 0.0
    %363 = vmatpush1.msra.mxu0 0.0
    %364 = vmatprep.subr.mxu0 0.0
    %365 = vmatpush1.msra.mxu0 0.0
    %366 = vmatprep.subr.mxu0 0.0
    %367 = vmatpush1.msra.mxu0 0.0
    %368 = vmatprep.mubr.f32.mxu0 0.0
    %369 = vmatmul.mubr.f32.gmra.mrb[0].mxu0 %v281
    %v370 = vpop.f32.mrb[0].mxu0
    %v371 = vadd.f32 %v277, %v370
    %v372 = vpop.f32.mrb[0].mxu0
    %373 = vmatprep.mubr.f32.mxu0 0.0
    %374 = vmatmul.mubr.f32.gmra.mrb[0].mxu0 %v284
    %v375 = vpop.f32.mrb[0].mxu0
    %v376 = vadd.f32 %v277, %v375
    %v377 = vpop.f32.mrb[0].mxu0
    %378 = vmatprep.mubr.f32.mxu0 0.0
    %379 = vmatmul.mubr.f32.gmra.mrb[0].mxu0 %v287
    %v380 = vpop.f32.mrb[0].mxu0
    %v381 = vadd.f32 %v277, %v380
    %v382 = vpop.f32.mrb[0].mxu0
    %383 = vmatprep.mubr.f32.mxu0 0.0
    %384 = vmatmul.mubr.f32.gmra.mrb[0].mxu0 %v290
    %v385 = vpop.f32.mrb[0].mxu0
    %v386 = vadd.f32 %v277, %v385
    %v387 = vpop.f32.mrb[0].mxu0
    %388 = vmatprep.mubr.f32.mxu0 0.0
    %389 = vmatmul.mubr.f32.gmra.mrb[0].mxu0 %v293
    %v390 = vpop.f32.mrb[0].mxu0
    %v391 = vadd.f32 %v277, %v390
    %v392 = vpop.f32.mrb[0].mxu0
    %393 = vmatprep.mubr.f32.mxu0 0.0
    %394 = vmatmul.mubr.f32.gmra.mrb[0].mxu0 %v296
    %v395 = vpop.f32.mrb[0].mxu0
    %v396 = vadd.f32 %v277, %v395
    %v397 = vpop.f32.mrb[0].mxu0
    %398 = vmatprep.mubr.f32.mxu0 0.0
    %399 = vmatmul.mubr.f32.gmra.mrb[0].mxu0 %v299
    %v400 = vpop.f32.mrb[0].mxu0
    %v401 = vadd.f32 %v277, %v400
    %v402 = vpop.f32.mrb[0].mxu0
    %403 = vmatprep.mubr.f32.mxu0 0.0
    %404 = vmatmul.mubr.f32.gmra.mrb[0].mxu0 %v302
    %v405 = vpop.f32.mrb[0].mxu0
    %v406 = vadd.f32 %v277, %v405
    %v407 = vpop.f32.mrb[0].mxu0
    %408 = vdwg.mxu0
    %vm409 = vcmp.ge.f32.partialorder %v371, 0.0
    %vm410 = vcmp.ge.f32.partialorder %v376, 0.0
    %vm411 = vcmp.ge.f32.partialorder %v381, 0.0
    %vm412 = vcmp.ge.f32.partialorder %v386, 0.0
    %v413 = vmul.f32 %v371, 0.1
    %v414 = vmul.f32 %v376, 0.1
    %v415 = vmul.f32 %v381, 0.1
    %v416 = vmul.f32 %v386, 0.1
    %v417 = vsel %vm409, %v371, %v413
    %v418 = vsel %vm410, %v376, %v414
    %v419 = vsel %vm411, %v381, %v415
    %v420 = vsel %vm412, %v386, %v416
    %vm421 = vcmask 261120
    %422 = vst.msk [vmem:[#allocation3] sm:$0xff] %vm421, %v417
    %423 = vst.msk [vmem:[#allocation3 + $0x8] sm:$0xff] %vm421, %v418
    %vm424 = vcmask 257024
    %425 = vst.msk [vmem:[#allocation3 + $0x10] sm:$0xf] %vm424, %v419
    %429 = vrot.lane.b32.xlu0 %v417, 32
    %v430 = vpop.permute.xlu0 %429
    %431 = vrot.lane.b32.xlu0 %v418, 32
    %v432 = vpop.permute.xlu0 %431
    %433 = vrot.lane.b32.xlu0 %v419, 32
    %v434 = vpop.permute.xlu0 %433
    %vm438 = vcmask 523523
    %439 = vst.msk [vmem:[#allocation3 - $0x3] sm:$0xf8] %vm438, %v430
    %vm440 = vcmask 523520
    %441 = vst.msk [vmem:[#allocation3 + $0x5] sm:$0xff] %vm440, %v432
    %vm442 = vcmask 522496
    %443 = vst.msk [vmem:[#allocation3 + $0xd] sm:$0x7f] %vm442, %v434
    %445 = vrot.lane.b32.xlu0 %v417, 64
    %v446 = vpop.permute.xlu0 %445
    %447 = vrot.lane.b32.xlu0 %v418, 64
    %v448 = vpop.permute.xlu0 %447
    %449 = vrot.lane.b32.xlu0 %v419, 64
    %v450 = vpop.permute.xlu0 %449
    %451 = vrot.lane.b32.xlu0 %v420, 64
    %v452 = vpop.permute.xlu0 %451
    %vm457 = vcmask 785926
    %458 = vst.msk [vmem:[#allocation3 - $0x6] sm:$0xc0] %vm457, %v446
    %vm459 = vcmask 785920
    %460 = vst.msk [vmem:[#allocation3 + $0x2] sm:$0xff] %vm459, %v448
    %461 = vst.msk [vmem:[#allocation3 + $0xa] sm:$0xff] %vm459, %v450
    %vm462 = vcmask 779776
    %463 = vst.msk [vmem:[#allocation3 + $0x12] sm:$0x3] %vm462, %v452
    %vm464 = vcmp.ge.f32.partialorder %v391, 0.0
    %vm465 = vcmp.ge.f32.partialorder %v396, 0.0
    %vm466 = vcmp.ge.f32.partialorder %v401, 0.0
    %vm467 = vcmp.ge.f32.partialorder %v406, 0.0
    %v468 = vmul.f32 %v391, 0.1
    %v469 = vmul.f32 %v396, 0.1
    %v470 = vmul.f32 %v401, 0.1
    %v471 = vmul.f32 %v406, 0.1
    %v472 = vsel %vm464, %v391, %v468
    %v473 = vsel %vm465, %v396, %v469
    %v474 = vsel %vm466, %v401, %v470
    %v475 = vsel %vm467, %v406, %v471
    %476 = vst.msk [vmem:[#allocation3 + $0x18] sm:$0xff] %vm421, %v472
    %477 = vst.msk [vmem:[#allocation3 + $0x20] sm:$0xff] %vm421, %v473
    %478 = vst.msk [vmem:[#allocation3 + $0x28] sm:$0xf] %vm424, %v474
    %482 = vrot.lane.b32.xlu0 %v472, 32
    %v483 = vpop.permute.xlu0 %482
    %484 = vrot.lane.b32.xlu0 %v473, 32
    %v485 = vpop.permute.xlu0 %484
    %486 = vrot.lane.b32.xlu0 %v474, 32
    %v487 = vpop.permute.xlu0 %486
    %491 = vst.msk [vmem:[#allocation3 + $0x15] sm:$0xf8] %vm438, %v483
    %492 = vst.msk [vmem:[#allocation3 + $0x1d] sm:$0xff] %vm440, %v485
    %493 = vst.msk [vmem:[#allocation3 + $0x25] sm:$0x7f] %vm442, %v487
    %495 = vrot.lane.b32.xlu0 %v472, 64
    %v496 = vpop.permute.xlu0 %495
    %497 = vrot.lane.b32.xlu0 %v473, 64
    %v498 = vpop.permute.xlu0 %497
    %499 = vrot.lane.b32.xlu0 %v474, 64
    %v500 = vpop.permute.xlu0 %499
    %501 = vrot.lane.b32.xlu0 %v475, 64
    %v502 = vpop.permute.xlu0 %501
    %507 = vst.msk [vmem:[#allocation3 + $0x12] sm:$0xc0] %vm457, %v496
    %508 = vst.msk [vmem:[#allocation3 + $0x1a] sm:$0xff] %vm459, %v498
    %509 = vst.msk [vmem:[#allocation3 + $0x22] sm:$0xff] %vm459, %v500
    %510 = vst.msk [vmem:[#allocation3 + $0x2a] sm:$0x3] %vm462, %v502
    %v511 = vld [vmem:[#allocation3] sm:$0xff]
    %v512 = vld [vmem:[#allocation3 + $0x8] sm:$0xff]
    %v513 = vld [vmem:[#allocation3 + $0x10] sm:$0xff]
    %v514 = vld [vmem:[#allocation3 + $0x18] sm:$0xff]
    %v515 = vld [vmem:[#allocation3 + $0x20] sm:$0xff]
    %v516 = vld [vmem:[#allocation3 + $0x28] sm:$0xff]
    %v517 = vld [vmem:[%s3] sm:$0xff]
    %v518 = vld [vmem:[%s3 + $0x8] sm:$0xff]
    %v519 = vld [vmem:[%s3 + $0x10] sm:$0xff]
    %v520 = vld [vmem:[%s3 + $0x18] sm:$0xff]
    %v521 = vld [vmem:[%s3 + $0x20] sm:$0xff]
    %v522 = vld [vmem:[%s3 + $0x28] sm:$0xff]
    %v523 = vld [vmem:[%s3 + $0x30] sm:$0xff]
    %v524 = vld [vmem:[%s3 + $0x38] sm:$0xff]
    %v525 = vld [vmem:[%s3 + $0x40] sm:$0xff]
    %v526 = vld [vmem:[%s3 + $0x48] sm:$0xff]
    %v527 = vld [vmem:[%s3 + $0x50] sm:$0xff]
    %v528 = vld [vmem:[%s3 + $0x58] sm:$0xff]
    %v529 = vld [vmem:[%s4] sm:$0x1]
    %v531 = vlaneseq
    %v532 = vshrl.u32 %v531, 7
    %v533 = vsub.s32 0, %v532
    %v534 = vrot.slane %v529, %v533
    %vm536 = vcmask 785408
    %v538 = vsel %vm536, %v511, 0
    %v541 = vsel %vm536, %v512, 0
    %v544 = vsel %vm536, %v513, 0
    %v547 = vsel %vm536, %v514, 0
    %v550 = vsel %vm536, %v515, 0
    %v553 = vsel %vm536, %v516, 0
    %555 = vmatprep.subr.mxu0 0.0
    %556 = vmatpush1.msra.mxu0 %v517
    %557 = vmatprep.subr.mxu0 0.0
    %558 = vmatpush1.msra.mxu0 %v518
    %559 = vmatprep.subr.mxu0 0.0
    %560 = vmatpush1.msra.mxu0 %v519
    %561 = vmatprep.subr.mxu0 0.0
    %562 = vmatpush1.msra.mxu0 %v520
    %563 = vmatprep.subr.mxu0 0.0
    %564 = vmatpush1.msra.mxu0 %v521
    %565 = vmatprep.subr.mxu0 0.0
    %566 = vmatpush1.msra.mxu0 %v522
    %567 = vmatprep.subr.mxu0 0.0
    %568 = vmatpush1.msra.mxu0 %v523
    %569 = vmatprep.subr.mxu0 0.0
    %570 = vmatpush1.msra.mxu0 %v524
    %571 = vmatprep.subr.mxu0 0.0
    %572 = vmatpush1.msra.mxu0 %v525
    %573 = vmatprep.subr.mxu0 0.0
    %574 = vmatpush1.msra.mxu0 %v526
    %575 = vmatprep.subr.mxu0 0.0
    %576 = vmatpush1.msra.mxu0 %v527
    %577 = vmatprep.subr.mxu0 0.0
    %578 = vmatpush1.msra.mxu0 %v528
    %579 = vmatprep.subr.mxu0 0.0
    %580 = vmatpush1.msra.mxu0 0.0
    %581 = vmatprep.subr.mxu0 0.0
    %582 = vmatpush1.msra.mxu0 0.0
    %583 = vmatprep.subr.mxu0 0.0
    %584 = vmatpush1.msra.mxu0 0.0
    %585 = vmatprep.subr.mxu0 0.0
    %586 = vmatpush1.msra.mxu0 0.0
    %587 = vmatprep.subr.mxu0 0.0
    %588 = vmatpush1.msra.mxu0 0.0
    %589 = vmatprep.subr.mxu0 0.0
    %590 = vmatpush1.msra.mxu0 0.0
    %591 = vmatprep.subr.mxu0 0.0
    %592 = vmatpush1.msra.mxu0 0.0
    %593 = vmatprep.subr.mxu0 0.0
    %594 = vmatpush1.msra.mxu0 0.0
    %595 = vmatprep.subr.mxu0 0.0
    %596 = vmatpush1.msra.mxu0 0.0
    %597 = vmatprep.subr.mxu0 0.0
    %598 = vmatpush1.msra.mxu0 0.0
    %599 = vmatprep.subr.mxu0 0.0
    %600 = vmatpush1.msra.mxu0 0.0
    %601 = vmatprep.subr.mxu0 0.0
    %602 = vmatpush1.msra.mxu0 0.0
    %603 = vmatprep.subr.mxu0 0.0
    %604 = vmatpush1.msra.mxu0 0.0
    %605 = vmatprep.subr.mxu0 0.0
    %606 = vmatpush1.msra.mxu0 0.0
    %607 = vmatprep.subr.mxu0 0.0
    %608 = vmatpush1.msra.mxu0 0.0
    %609 = vmatprep.subr.mxu0 0.0
    %610 = vmatpush1.msra.mxu0 0.0
    %611 = vmatprep.subr.mxu0 0.0
    %612 = vmatpush1.msra.mxu0 0.0
    %613 = vmatprep.subr.mxu0 0.0
    %614 = vmatpush1.msra.mxu0 0.0
    %615 = vmatprep.subr.mxu0 0.0
    %616 = vmatpush1.msra.mxu0 0.0
    %617 = vmatprep.subr.mxu0 0.0
    %618 = vmatpush1.msra.mxu0 0.0
    %619 = vmatprep.mubr.f32.mxu0 0.0
    %620 = vmatmul.mubr.f32.gmra.mrb[0].mxu0 %v538
    %v621 = vpop.f32.mrb[0].mxu0
    %v622 = vadd.f32 %v534, %v621
    %v623 = vpop.f32.mrb[0].mxu0
    %624 = vmatprep.mubr.f32.mxu0 0.0
    %625 = vmatmul.mubr.f32.gmra.mrb[0].mxu0 %v541
    %v626 = vpop.f32.mrb[0].mxu0
    %v627 = vadd.f32 %v534, %v626
    %v628 = vpop.f32.mrb[0].mxu0
    %629 = vmatprep.mubr.f32.mxu0 0.0
    %630 = vmatmul.mubr.f32.gmra.mrb[0].mxu0 %v544
    %v631 = vpop.f32.mrb[0].mxu0
    %v632 = vadd.f32 %v534, %v631
    %v633 = vpop.f32.mrb[0].mxu0
    %634 = vmatprep.mubr.f32.mxu0 0.0
    %635 = vmatmul.mubr.f32.gmra.mrb[0].mxu0 %v547
    %v636 = vpop.f32.mrb[0].mxu0
    %v637 = vadd.f32 %v534, %v636
    %v638 = vpop.f32.mrb[0].mxu0
    %639 = vmatprep.mubr.f32.mxu0 0.0
    %640 = vmatmul.mubr.f32.gmra.mrb[0].mxu0 %v550
    %v641 = vpop.f32.mrb[0].mxu0
    %v642 = vadd.f32 %v534, %v641
    %v643 = vpop.f32.mrb[0].mxu0
    %644 = vmatprep.mubr.f32.mxu0 0.0
    %645 = vmatmul.mubr.f32.gmra.mrb[0].mxu0 %v553
    %v646 = vpop.f32.mrb[0].mxu0
    %v647 = vadd.f32 %v534, %v646
    %v648 = vpop.f32.mrb[0].mxu0
    %649 = vdwg.mxu0
    %vm653 = vcmask 1044480
    %v654 = vrot.slane %v371, 3
    %v655 = vrot.slane %v376, 3
    %v656 = vsel %vm653, %v654, %v655
    %v657 = vrot.slane %v381, 3
    %v658 = vsel %vm653, %v655, %v657
    %v662 = vadd.f32 %v622, %v656
    %v663 = vadd.f32 %v627, %v658
    %v664 = vadd.f32 %v632, %v657
    %v668 = vrot.slane %v391, 3
    %v669 = vrot.slane %v396, 3
    %v670 = vsel %vm653, %v668, %v669
    %v671 = vrot.slane %v401, 3
    %v672 = vsel %vm653, %v669, %v671
    %v676 = vadd.f32 %v637, %v670
    %v677 = vadd.f32 %v642, %v672
    %v678 = vadd.f32 %v647, %v671
    %vm679 = vcmp.ge.f32.partialorder %v662, 0.0
    %vm680 = vcmp.ge.f32.partialorder %v663, 0.0
    %vm681 = vcmp.ge.f32.partialorder %v664, 0.0
    %v682 = vmul.f32 %v662, 0.1
    %v683 = vmul.f32 %v663, 0.1
    %v684 = vmul.f32 %v664, 0.1
    %v685 = vsel %vm679, %v662, %v682
    %v686 = vsel %vm680, %v663, %v683
    %v687 = vsel %vm681, %v664, %v684
    %688 = vst.msk [vmem:[#allocation3] sm:$0xff] %vm421, %v685
    %vm689 = vcmask 259072
    %690 = vst.msk [vmem:[#allocation3 + $0x8] sm:$0x3f] %vm689, %v686
    %694 = vrot.lane.b32.xlu0 %v685, 32
    %v695 = vpop.permute.xlu0 %694
    %696 = vrot.lane.b32.xlu0 %v686, 32
    %v697 = vpop.permute.xlu0 %696
    %698 = vrot.lane.b32.xlu0 %v687, 32
    %v699 = vpop.permute.xlu0 %698
    %703 = vst.msk [vmem:[#allocation3 - $0x3] sm:$0xf8] %vm438, %v695
    %704 = vst.msk [vmem:[#allocation3 + $0x5] sm:$0xff] %vm440, %v697
    %vm705 = vcmask 516352
    %706 = vst.msk [vmem:[#allocation3 + $0xd] sm:$0x1] %vm705, %v699
    %707 = vrot.lane.b32.xlu0 %v685, 64
    %v708 = vpop.permute.xlu0 %707
    %709 = vrot.lane.b32.xlu0 %v686, 64
    %v710 = vpop.permute.xlu0 %709
    %711 = vrot.lane.b32.xlu0 %v687, 64
    %v712 = vpop.permute.xlu0 %711
    %716 = vst.msk [vmem:[#allocation3 - $0x6] sm:$0xc0] %vm457, %v708
    %717 = vst.msk [vmem:[#allocation3 + $0x2] sm:$0xff] %vm459, %v710
    %vm718 = vcmask 781824
    %719 = vst.msk [vmem:[#allocation3 + $0xa] sm:$0xf] %vm718, %v712
    %vm720 = vcmp.ge.f32.partialorder %v676, 0.0
    %vm721 = vcmp.ge.f32.partialorder %v677, 0.0
    %vm722 = vcmp.ge.f32.partialorder %v678, 0.0
    %v723 = vmul.f32 %v676, 0.1
    %v724 = vmul.f32 %v677, 0.1
    %v725 = vmul.f32 %v678, 0.1
    %v726 = vsel %vm720, %v676, %v723
    %v727 = vsel %vm721, %v677, %v724
    %v728 = vsel %vm722, %v678, %v725
    %729 = vst.msk [vmem:[#allocation3 + $0x10] sm:$0xff] %vm421, %v726
    %730 = vst.msk [vmem:[#allocation3 + $0x18] sm:$0x3f] %vm689, %v727
    %734 = vrot.lane.b32.xlu0 %v726, 32
    %v735 = vpop.permute.xlu0 %734
    %736 = vrot.lane.b32.xlu0 %v727, 32
    %v737 = vpop.permute.xlu0 %736
    %738 = vrot.lane.b32.xlu0 %v728, 32
    %v739 = vpop.permute.xlu0 %738
    %743 = vst.msk [vmem:[#allocation3 + $0xd] sm:$0xf8] %vm438, %v735
    %744 = vst.msk [vmem:[#allocation3 + $0x15] sm:$0xff] %vm440, %v737
    %745 = vst.msk [vmem:[#allocation3 + $0x1d] sm:$0x1] %vm705, %v739
    %746 = vrot.lane.b32.xlu0 %v726, 64
    %v747 = vpop.permute.xlu0 %746
    %748 = vrot.lane.b32.xlu0 %v727, 64
    %v749 = vpop.permute.xlu0 %748
    %750 = vrot.lane.b32.xlu0 %v728, 64
    %v751 = vpop.permute.xlu0 %750
    %755 = vst.msk [vmem:[#allocation3 + $0xa] sm:$0xc0] %vm457, %v747
    %756 = vst.msk [vmem:[#allocation3 + $0x12] sm:$0xff] %vm459, %v749
    %757 = vst.msk [vmem:[#allocation3 + $0x1a] sm:$0xf] %vm718, %v751
    %v758 = vld [vmem:[#allocation3] sm:$0xff]
    %v759 = vld [vmem:[#allocation3 + $0x8] sm:$0xff]
    %v760 = vld [vmem:[#allocation3 + $0x10] sm:$0xff]
    %v761 = vld [vmem:[#allocation3 + $0x18] sm:$0xff]
    %s762 = scalar_lea.vmem %s3, 96
    %v763 = vld [vmem:[%s762] sm:$0xff]
    %v764 = vld [vmem:[%s762 + $0x8] sm:$0xff]
    %v765 = vld [vmem:[%s762 + $0x10] sm:$0xff]
    %v766 = vld [vmem:[%s762 + $0x18] sm:$0xff]
    %v767 = vld [vmem:[%s762 + $0x20] sm:$0xff]
    %v768 = vld [vmem:[%s762 + $0x28] sm:$0xff]
    %v769 = vld [vmem:[%s762 + $0x30] sm:$0xff]
    %v770 = vld [vmem:[%s762 + $0x38] sm:$0xff]
    %v771 = vld [vmem:[%s762 + $0x40] sm:$0xff]
    %v772 = vld [vmem:[%s762 + $0x48] sm:$0xff]
    %v773 = vld [vmem:[%s762 + $0x50] sm:$0xff]
    %v774 = vld [vmem:[%s762 + $0x58] sm:$0xff]
    %s775 = scalar_lea.vmem %s4, 1
    %v776 = vld [vmem:[%s775] sm:$0x1]
    %v778 = vlaneseq
    %v779 = vshrl.u32 %v778, 7
    %v780 = vsub.s32 0, %v779
    %v781 = vrot.slane %v776, %v780
    %v784 = vsel %vm536, %v758, 0
    %v787 = vsel %vm536, %v759, 0
    %v790 = vsel %vm536, %v760, 0
    %v793 = vsel %vm536, %v761, 0
    %795 = vmatprep.subr.mxu0 0.0
    %796 = vmatpush1.msra.mxu0 %v763
    %797 = vmatprep.subr.mxu0 0.0
    %798 = vmatpush1.msra.mxu0 %v764
    %799 = vmatprep.subr.mxu0 0.0
    %800 = vmatpush1.msra.mxu0 %v765
    %801 = vmatprep.subr.mxu0 0.0
    %802 = vmatpush1.msra.mxu0 %v766
    %803 = vmatprep.subr.mxu0 0.0
    %804 = vmatpush1.msra.mxu0 %v767
    %805 = vmatprep.subr.mxu0 0.0
    %806 = vmatpush1.msra.mxu0 %v768
    %807 = vmatprep.subr.mxu0 0.0
    %808 = vmatpush1.msra.mxu0 %v769
    %809 = vmatprep.subr.mxu0 0.0
    %810 = vmatpush1.msra.mxu0 %v770
    %811 = vmatprep.subr.mxu0 0.0
    %812 = vmatpush1.msra.mxu0 %v771
    %813 = vmatprep.subr.mxu0 0.0
    %814 = vmatpush1.msra.mxu0 %v772
    %815 = vmatprep.subr.mxu0 0.0
    %816 = vmatpush1.msra.mxu0 %v773
    %817 = vmatprep.subr.mxu0 0.0
    %818 = vmatpush1.msra.mxu0 %v774
    %819 = vmatprep.subr.mxu0 0.0
    %820 = vmatpush1.msra.mxu0 0.0
    %821 = vmatprep.subr.mxu0 0.0
    %822 = vmatpush1.msra.mxu0 0.0
    %823 = vmatprep.subr.mxu0 0.0
    %824 = vmatpush1.msra.mxu0 0.0
    %825 = vmatprep.subr.mxu0 0.0
    %826 = vmatpush1.msra.mxu0 0.0
    %827 = vmatprep.subr.mxu0 0.0
    %828 = vmatpush1.msra.mxu0 0.0
    %829 = vmatprep.subr.mxu0 0.0
    %830 = vmatpush1.msra.mxu0 0.0
    %831 = vmatprep.subr.mxu0 0.0
    %832 = vmatpush1.msra.mxu0 0.0
    %833 = vmatprep.subr.mxu0 0.0
    %834 = vmatpush1.msra.mxu0 0.0
    %835 = vmatprep.subr.mxu0 0.0
    %836 = vmatpush1.msra.mxu0 0.0
    %837 = vmatprep.subr.mxu0 0.0
    %838 = vmatpush1.msra.mxu0 0.0
    %839 = vmatprep.subr.mxu0 0.0
    %840 = vmatpush1.msra.mxu0 0.0
    %841 = vmatprep.subr.mxu0 0.0
    %842 = vmatpush1.msra.mxu0 0.0
    %843 = vmatprep.subr.mxu0 0.0
    %844 = vmatpush1.msra.mxu0 0.0
    %845 = vmatprep.subr.mxu0 0.0
    %846 = vmatpush1.msra.mxu0 0.0
    %847 = vmatprep.subr.mxu0 0.0
    %848 = vmatpush1.msra.mxu0 0.0
    %849 = vmatprep.subr.mxu0 0.0
    %850 = vmatpush1.msra.mxu0 0.0
    %851 = vmatprep.subr.mxu0 0.0
    %852 = vmatpush1.msra.mxu0 0.0
    %853 = vmatprep.subr.mxu0 0.0
    %854 = vmatpush1.msra.mxu0 0.0
    %855 = vmatprep.subr.mxu0 0.0
    %856 = vmatpush1.msra.mxu0 0.0
    %857 = vmatprep.subr.mxu0 0.0
    %858 = vmatpush1.msra.mxu0 0.0
    %859 = vmatprep.mubr.f32.mxu0 0.0
    %860 = vmatmul.mubr.f32.gmra.mrb[0].mxu0 %v784
    %v861 = vpop.f32.mrb[0].mxu0
    %v862 = vadd.f32 %v781, %v861
    %v863 = vpop.f32.mrb[0].mxu0
    %864 = vmatprep.mubr.f32.mxu0 0.0
    %865 = vmatmul.mubr.f32.gmra.mrb[0].mxu0 %v787
    %v866 = vpop.f32.mrb[0].mxu0
    %v867 = vadd.f32 %v781, %v866
    %v868 = vpop.f32.mrb[0].mxu0
    %869 = vmatprep.mubr.f32.mxu0 0.0
    %870 = vmatmul.mubr.f32.gmra.mrb[0].mxu0 %v790
    %v871 = vpop.f32.mrb[0].mxu0
    %v872 = vadd.f32 %v781, %v871
    %v873 = vpop.f32.mrb[0].mxu0
    %874 = vmatprep.mubr.f32.mxu0 0.0
    %875 = vmatmul.mubr.f32.gmra.mrb[0].mxu0 %v793
    %v876 = vpop.f32.mrb[0].mxu0
    %v877 = vadd.f32 %v781, %v876
    %v878 = vpop.f32.mrb[0].mxu0
    %879 = vdwg.mxu0
    %v883 = vrot.slane %v662, 3
    %v884 = vrot.slane %v663, 3
    %v885 = vsel %vm653, %v883, %v884
    %v886 = vrot.slane %v664, 3
    %v887 = vsel %vm653, %v884, %v886
    %v890 = vadd.f32 %v862, %v885
    %v891 = vadd.f32 %v867, %v887
    %v895 = vrot.slane %v676, 3
    %v896 = vrot.slane %v677, 3
    %v897 = vsel %vm653, %v895, %v896
    %v898 = vrot.slane %v678, 3
    %v899 = vsel %vm653, %v896, %v898
    %v902 = vadd.f32 %v872, %v897
    %v903 = vadd.f32 %v877, %v899
    %v904 = vsel %vm421, %v890, 0.0
    %v905 = vsel %vm689, %v891, 0.0
    %v906 = vadd.f32 %v904, %v905
    %v907 = vrot.slane %v906, 4
    %v908 = vadd.f32 %v906, %v907
    %v909 = vrot.slane %v908, 2
    %v910 = vadd.f32 %v908, %v909
    %v911 = vrot.slane %v910, 1
    %v912 = vadd.f32 %v910, %v911
    %v913 = vrcp.pop 14.0
    %v914 = vmul.f32 %v912, %v913
    %v915 = vsel %vm421, %v902, 0.0
    %v916 = vsel %vm689, %v903, 0.0
    %v917 = vadd.f32 %v915, %v916
    %v918 = vrot.slane %v917, 4
    %v919 = vadd.f32 %v917, %v918
    %v920 = vrot.slane %v919, 2
    %v921 = vadd.f32 %v919, %v920
    %v922 = vrot.slane %v921, 1
    %v923 = vadd.f32 %v921, %v922
    %v924 = vmul.f32 %v923, %v913
    %vm925 = vcmask 1040384
    %v926 = vsel %vm925, %v914, %v924
    %vm927 = vcmask 254976
    %928 = vst.msk [vmem:[#allocation4] sm:$0x3] %vm927, %v926
    // Predicated region
    $region22: #{tpu_custom_call.1} parent=1 // pred_check
      _
    $region23: #{tpu_custom_call.1} parent=1 // pred_check_branch
      %930 = sbr.rel (0) target = $region25
    $region24: #{tpu_custom_call.1} parent=1 // pred_region
      %s932 = ssub.s32 32, 32
      %933 = vsyncadd [#allocation5], %s932
      %s935 = sshll.u32 [#allocation4], 4
      %s936 = int_to_ptr.vmem [resolvable:$true] %s935
      %938 = dma.vmem_to_hbm [thread:$0]  %s936, 32, %s5, [#allocation5]
    $region25: #{tpu_custom_call.1} parent=1 // pred_fallthru
      _
    // Predicated region
    $region26: #{tpu_custom_call.1} parent=1 // pred_check
      _
    $region27: #{tpu_custom_call.1} parent=1 // pred_check_branch
      %940 = sbr.rel (0) target = $region29
    $region28: #{tpu_custom_call.1} parent=1 // pred_region
      %941 = dma.done [#allocation5], 32
    $region29: #{tpu_custom_call.1} parent=1 // pred_fallthru
      _
    %942 = vsyncpa [#allocation5], 1

</llo_original>
